<compile_context>
chip_gen: v5e
topology: v5e:2x2
jax: 0.10.0
libtpu: 0.0.40
codegen_flags: <defaults>
</compile_context>

<pallas_src>
import jax
import jax.numpy as jnp
from jax.experimental import pallas as pl
from jax.experimental.pallas import tpu as pltpu


def _masked_scale_kernel(x_ref, m_ref, o_ref):
    # x_ref: (TB, TF) lane-dense tile; m_ref: (TB, 1) per-row scaled keep
    # values.  Broadcast multiply on the VPU; stores are full-lane.
    o_ref[...] = x_ref[...] * m_ref[...]


def _choose_tiles(B, F, itemsize, target_bytes=4 << 20):
    """Pick (TB, TF) so one block is ~target_bytes and satisfies the
    (8, 128)-or-full-dim BlockSpec constraint."""
    # Lane (last) dim: multiple of 128, or the full feature dim.
    if F % 128 == 0 and F * itemsize > target_bytes // 8:
        TF = max(128, ((target_bytes // (8 * itemsize)) // 128) * 128)
        TF = min(TF, F)
    else:
        TF = F
    # Sublane (row) dim: multiple of 8, or the full batch dim.
    rows = max(1, target_bytes // max(1, TF * itemsize))
    if rows >= B:
        TB = B
    else:
        TB = max(8, (rows // 8) * 8)
        if TB > B:
            TB = B
    return TB, TF


def apply_sample_mask(x, mask_per_sample):
    """x: (B, C, H, W); mask_per_sample: (B,) float — returns x * mask[b]."""
    B = x.shape[0]
    F = 1
    for d in x.shape[1:]:
        F *= d

    x2 = x.reshape(B, F)                       # lane-dense 2-D view
    m2 = mask_per_sample.astype(x.dtype).reshape(B, 1)

    TB, TF = _choose_tiles(B, F, x2.dtype.itemsize)
    grid = (pl.cdiv(B, TB), pl.cdiv(F, TF))

    out2 = pl.pallas_call(
        _masked_scale_kernel,
        out_shape=jax.ShapeDtypeStruct((B, F), x2.dtype),
        grid_spec=pltpu.PrefetchScalarGridSpec(
            num_scalar_prefetch=0,
            grid=grid,
            in_specs=[
                pl.BlockSpec((TB, TF), lambda i, j: (i, j)),
                # Mask block only depends on the row-block index -> fetched
                # once per row block, not once per grid step.
                pl.BlockSpec((TB, 1), lambda i, j: (i, 0)),
            ],
            out_specs=pl.BlockSpec((TB, TF), lambda i, j: (i, j)),
        ),
        compiler_params=pltpu.CompilerParams(
            dimension_semantics=("parallel", "parallel"),
        ),
    )(x2, m2)

    return out2.reshape(x.shape)


class MatchedDropPathPallas:
    """JAX/Pallas port of MatchedDropPath. mode: 0 no-drop, 1 drop, 2 reuse.

    Note: self.mode / self.pre_mask are mutable Python state (like the
    PyTorch buffers); do not wrap __call__ directly in jax.jit — jit the
    pallas wrapper / surrounding model instead, or thread the mask as
    functional state.
    """

    def __init__(self, drop_prob=None, scale_by_keep=True):
        self.drop_prob = drop_prob
        self.scale_by_keep = scale_by_keep
        self.mode = 0
        self.pre_mask = None  # stored as per-sample (B,) scaled keep values

    def __call__(self, x, key=None):
        if self.mode == 0:
            return x
        elif self.mode == 1:
            keep_prob = 1.0 - self.drop_prob
            # drop_path(ones_like(input), p, True, scale_by_keep):
            # per-sample Bernoulli(keep_prob), optionally divided by keep_prob.
            keep = jax.random.bernoulli(
                key, keep_prob, (x.shape[0],)
            ).astype(jnp.float32)
            if keep_prob > 0.0 and self.scale_by_keep:
                keep = keep / keep_prob
            self.pre_mask = keep
            return apply_sample_mask(x, keep)
        elif self.mode == 2:
            assert self.pre_mask is not None
            mask = self.pre_mask
            if mask.shape[0] != x.shape[0]:
                # PyTorch: mask.expand((2,) + (-1,)*ndim).reshape(input.shape)
                # == repeat the whole cached mask twice along batch.
                assert x.shape[0] == 2 * mask.shape[0], (
                    "mode 2 batch mismatch must be exactly 2x the cached mask"
                )
                mask = jnp.concatenate([mask, mask], axis=0)
            return apply_sample_mask(x, mask)
        else:
            raise ValueError(f"unknown mode {self.mode}")


if __name__ == "__main__":
    root = jax.random.PRNGKey(0)
    k_x, k_x2, k_mask = jax.random.split(root, 3)

    B, C, H, W = 2, 4, 16, 16
    x = jax.random.normal(k_x, (B, C, H, W), dtype=jnp.float32)

    module = MatchedDropPathPallas(drop_prob=0.5, scale_by_keep=True)

    # --- mode 0: identity ---
    module.mode = 0
    out0 = jax.block_until_ready(module(x))
    assert jnp.allclose(out0, x)

    # --- mode 1: fresh droppath mask ---
    module.mode = 1
    out1 = jax.block_until_ready(module(x, key=k_mask))
    keep_prob = 1.0 - module.drop_prob
    keep_ref = jax.random.bernoulli(k_mask, keep_prob, (B,)).astype(jnp.float32)
    keep_ref = keep_ref / keep_prob
    ref1 = x * keep_ref.reshape(B, 1, 1, 1)
    assert jnp.allclose(out1, ref1, atol=1e-6, rtol=1e-6)

    # --- mode 2: reuse mask on a doubled batch (expand path) ---
    module.mode = 2
    x2 = jax.random.normal(k_x2, (2 * B, C, H, W), dtype=jnp.float32)
    out2 = jax.block_until_ready(module(x2))
    mask_expanded = jnp.concatenate([keep_ref, keep_ref], axis=0)
    ref2 = x2 * mask_expanded.reshape(2 * B, 1, 1, 1)
    assert jnp.allclose(out2, ref2, atol=1e-6, rtol=1e-6)

    # --- bf16 path: lane-dense layout packs (16,128) sublane pairs cleanly ---
    module.mode = 1
    x_bf16 = x.astype(jnp.bfloat16)
    out_bf16 = jax.block_until_ready(module(x_bf16, key=k_mask))
    ref_bf16 = (x_bf16 * keep_ref.astype(jnp.bfloat16).reshape(B, 1, 1, 1))
    assert jnp.allclose(out_bf16.astype(jnp.float32),
                        ref_bf16.astype(jnp.float32), atol=1e-2, rtol=1e-2)

    print("KERNEL_OK")
</pallas_src>

<mosaic_0001>
module attributes {stable_mosaic.version = 11 : i64} {
  func.func @_masked_scale_kernel(%arg0: i32, %arg1: i32, %arg2: memref<2x1024xf32, #tpu.memory_space<vmem>>, %arg3: memref<2x1xf32, #tpu.memory_space<vmem>>, %arg4: memref<2x1024xf32, #tpu.memory_space<vmem>>) attributes {dimension_semantics = [#tpu.dimension_semantics<parallel>, #tpu.dimension_semantics<parallel>], iteration_bounds = array<i64: 1, 1>, scalar_prefetch = 0 : i64, scratch_operands = 0 : i64, tpu.core_type = #tpu.core_type<tc>, window_params = [{transform_indices = @transform_0, window_bounds = array<i64: 2, 1024>}, {transform_indices = @transform_1, window_bounds = array<i64: 2, 1>}, {transform_indices = @transform_2, window_bounds = array<i64: 2, 1024>}]} {
    %c0 = arith.constant 0 : index
    %c0_0 = arith.constant 0 : index
    %0 = vector.load %arg2[%c0, %c0_0] : memref<2x1024xf32, #tpu.memory_space<vmem>>, vector<2x1024xf32>
    %c0_1 = arith.constant 0 : index
    %c0_2 = arith.constant 0 : index
    %1 = vector.load %arg3[%c0_1, %c0_2] : memref<2x1xf32, #tpu.memory_space<vmem>>, vector<2x1xf32>
    %2 = vector.broadcast %1 : vector<2x1xf32> to vector<2x1024xf32>
    %3 = arith.mulf %0, %2 : vector<2x1024xf32>
    %c0_3 = arith.constant 0 : index
    %c0_4 = arith.constant 0 : index
    %4 = vector.load %arg4[%c0_3, %c0_4] : memref<2x1024xf32, #tpu.memory_space<vmem>>, vector<2x1024xf32>
    tpu.vector_store %arg4[%c0_3, %c0_4], %3 {strides = array<i32>} : memref<2x1024xf32, #tpu.memory_space<vmem>>, vector<2x1024xf32>,
    return
  }
  func.func @transform_0(%arg0: i32, %arg1: i32) -> (i32, i32) {
    %c0_i32 = arith.constant 0 : i32
    return %arg0, %arg1 : i32, i32
  }
  func.func @transform_1(%arg0: i32, %arg1: i32) -> (i32, i32) {
    %c0_i32 = arith.constant 0 : i32
    %c0_i32_0 = arith.constant 0 : i32
    return %arg0, %c0_i32 : i32, i32
  }
  func.func @transform_2(%arg0: i32, %arg1: i32) -> (i32, i32) {
    %c0_i32 = arith.constant 0 : i32
    return %arg0, %arg1 : i32, i32
  }
}

</mosaic_0001>

<llo_original>
// kernel: tpu_custom_call.1
$region0: #{tpu_custom_call.1}
  #allocation0 [shape = 'u32[]', space=smem, size = 0x4, offset = 0x4, fixed_abs, tag = 'smem constant byte address 0x4 - core index']
  #allocation1 [shape = 'u32[72,128]{1,0:T(1,128)}', space=vmem, size = 0x9000, scoped, tag = 'internal scratch']
  %s0 = inlined_call_operand.hbm [shape: f32[2,1024], index: 0, kind: input, shape index: {}]
  %s1 = inlined_call_operand.vmem [shape: f32[2,1], index: 1, kind: input, shape index: {}]
  %s2 = inlined_call_operand.hbm [shape: f32[2,1024], index: 2, kind: output, shape index: {}]
  %s3 = sld [smem:[#allocation0]]
  $region22: #{tpu_custom_call.1} parent=0
    _
  %s5 = ssub.s32 1, %s3
  %s6 = scalar_select 0, %s5, %s3
  $region1: #{tpu_custom_call.1} parent=0
    #allocation2 [shape = 'u8[8192]{0}', space=vmem, size = 0x2000, scoped, tag = 'input window, operand 0, single buffered']
    #allocation3 [shape = 's32[1]{0}', space=sflag, size = 0x4, scoped, tag = 'scoped memory for tpu_custom_call.1']
    #allocation4 [shape = 's32[1]{0}', space=sflag, size = 0x4, scoped, tag = 'scoped memory for tpu_custom_call.1']
    #allocation5 [shape = 'u8[8192]{0}', space=vmem, size = 0x2000, scoped, tag = 'output window, operand 0, single buffered']
    %7 = vsyncpa [#allocation3], 0
    %8 = vsyncpa [#allocation4], 0
    // Predicated region
    $region2: #{tpu_custom_call.1} parent=1 // pred_check
      _
    $region3: #{tpu_custom_call.1} parent=1 // pred_check_branch
      %10 = sbr.rel (0) target = $region5
    $region4: #{tpu_custom_call.1} parent=1 // pred_region
      %12 = vsyncadd [#allocation3], 0
      %s14 = sshll.u32 %s0, 4
      %s15 = int_to_ptr.hbm [resolvable:$true] %s14
      %s16 = sshll.u32 [#allocation2], 4
      %s17 = int_to_ptr.vmem [resolvable:$true] %s16
      %19 = dma.hbm_to_vmem [thread:$0]  %s15, 256, %s17, [#allocation3]
    $region5: #{tpu_custom_call.1} parent=1 // pred_fallthru
      _
    // Predicated region
    $region6: #{tpu_custom_call.1} parent=1 // pred_check
      _
    $region7: #{tpu_custom_call.1} parent=1 // pred_check_branch
      %21 = sbr.rel (0) target = $region9
    $region8: #{tpu_custom_call.1} parent=1 // pred_region
      _
    $region9: #{tpu_custom_call.1} parent=1 // pred_fallthru
      _
    // Predicated region
    $region10: #{tpu_custom_call.1} parent=1 // pred_check
      _
    $region11: #{tpu_custom_call.1} parent=1 // pred_check_branch
      %23 = sbr.rel (0) target = $region13
    $region12: #{tpu_custom_call.1} parent=1 // pred_region
      %25 = dma.done [#allocation3], 256
    $region13: #{tpu_custom_call.1} parent=1 // pred_fallthru
      _
    %v26 = vld [vmem:[#allocation2] sm:$0xff]
    %v27 = vld [vmem:[#allocation2 + $0x8] sm:$0xff]
    %v28 = vld [vmem:[%s1] sm:$0x3]
    %30 = vset.pattern.permute.xlu0 0
    %31 = vperm.xlu0 %30, %v28
    %v32 = vpop.permute.xlu0 %31
    %v34 = vunpack.c.l.s4 269488144
    %v35 = vunpack.c.0.s8 %v34
    %v36 = vperm.slane %v32, %v35
    %v38 = vmul.f32 %v26, %v36
    %v39 = vmul.f32 %v27, %v36
    %40 = vst [vmem:[#allocation5] sm:$0xff] %v38
    %41 = vst [vmem:[#allocation5 + $0x8] sm:$0xff] %v39
    // Predicated region
    $region14: #{tpu_custom_call.1} parent=1 // pred_check
      _
    $region15: #{tpu_custom_call.1} parent=1 // pred_check_branch
      %43 = sbr.rel (0) target = $region17
    $region16: #{tpu_custom_call.1} parent=1 // pred_region
      %45 = vsyncadd [#allocation4], 0
      %s47 = sshll.u32 [#allocation5], 4
      %s48 = int_to_ptr.vmem [resolvable:$true] %s47
      %s49 = sshll.u32 %s2, 4
      %s50 = int_to_ptr.hbm [resolvable:$true] %s49
      %52 = dma.vmem_to_hbm [thread:$0]  %s48, 256, %s50, [#allocation4]
    $region17: #{tpu_custom_call.1} parent=1 // pred_fallthru
      _
    // Predicated region
    $region18: #{tpu_custom_call.1} parent=1 // pred_check
      _
    $region19: #{tpu_custom_call.1} parent=1 // pred_check_branch
      %54 = sbr.rel (0) target = $region21
    $region20: #{tpu_custom_call.1} parent=1 // pred_region
      %56 = dma.done [#allocation4], 256
    $region21: #{tpu_custom_call.1} parent=1 // pred_fallthru
      _
    %57 = vsyncpa [#allocation3], 1
    %58 = vsyncpa [#allocation4], 1

</llo_original>
